<compile_context>
chip_gen: v7x
topology: tpu7x:2x2x1
jax: 0.10.0
libtpu: 0.0.40
codegen_flags: <defaults>
</compile_context>

<pallas_src>
import jax
import jax.numpy as jnp
from jax.experimental import pallas as pl
from jax.experimental.pallas import tpu as pltpu

_LANE = 128      # lane width of a vreg
_SUBLANE = 8     # sublane count of a vreg (f32)


def _round_up(v, m):
    return ((v + m - 1) // m) * m


def _discriminator_kernel(x_ref, w1_ref, b1_ref, w2_ref, b2_ref, o_ref):
    # Entire MLP for one batch tile, fused in VMEM. Feature dims are pre-padded
    # to 128 lanes by the wrapper, so every op below is full-width.
    x = x_ref[...]

    # Linear 1: [tm, infeat] @ [infeat, hid_p] + [1, hid_p]   (MXU, f32 accum)
    h = jnp.dot(x, w1_ref[...], preferred_element_type=jnp.float32) + b1_ref[...]

    # LeakyReLU (PyTorch default negative_slope = 0.01)
    h = jnp.where(h > 0, h, 0.01 * h)

    # Dropout: identity (eval mode).
    # TODO(synk): train-mode dropout mask via pltpu.prng_seed / prng_random_bits.

    # Linear 2: [tm, hid_p] @ [hid_p, out_p] + [1, out_p]     (MXU, f32 accum)
    logits = jnp.dot(h, w2_ref[...], preferred_element_type=jnp.float32) + b2_ref[...]

    # Sigmoid: exp and the approximate reciprocal both issue on the EUP slot.
    o_ref[...] = pl.reciprocal(1.0 + jnp.exp(-logits), approx=True).astype(o_ref.dtype)


def discriminator_forward(x, w1, b1, w2, b2, *, tile_m=None):
    """Fused Discriminator forward (eval mode).

    x : [N, infeat]            float32
    w1: [infeat, hidfeat]      (transpose of torch nn.Linear weight)
    b1: [hidfeat] or [1, hidfeat]
    w2: [hidfeat, outfeat]
    b2: [outfeat] or [1, outfeat]
    returns [N, outfeat]
    """
    N, infeat = x.shape
    hidfeat = w1.shape[1]
    outfeat = w2.shape[1]

    # Lane-dense padded feature widths (multiples of 128).
    hid_p = _round_up(max(hidfeat, _LANE), _LANE)
    out_p = _round_up(max(outfeat, _LANE), _LANE)

    # Large, sublane-aligned row tile; keep >=2 grid steps when N allows so the
    # "parallel" batch axis can be split across v7x's two TensorCores.
    # VMEM check (f32, tile_m=1024, infeat<=out_p): x tile + out tile, double
    # buffered, plus resident weights -> well under the 32 MiB scoped default.
    if tile_m is None:
        tile_m = min(1024, _round_up(pl.cdiv(N, 2), _SUBLANE))
        tile_m = max(tile_m, _SUBLANE)
    else:
        tile_m = _round_up(max(tile_m, _SUBLANE), _SUBLANE)

    n_pad = _round_up(N, tile_m)

    # Zero-pad only when needed. Extra x rows are dead (sliced away); extra w1
    # columns / b1 lanes give h_pad = 0 which LeakyReLU keeps at 0; extra w2
    # rows are zero so padded hidden lanes contribute nothing; padded output
    # columns are sliced away.
    x_p = x if n_pad == N else jnp.pad(x, ((0, n_pad - N), (0, 0)))
    w1_p = w1 if hid_p == hidfeat else jnp.pad(w1, ((0, 0), (0, hid_p - hidfeat)))
    b1_2d = jnp.reshape(b1, (1, -1))
    b1_p = b1_2d if hid_p == hidfeat else jnp.pad(b1_2d, ((0, 0), (0, hid_p - hidfeat)))
    if hid_p == hidfeat and out_p == outfeat:
        w2_p = w2
    else:
        w2_p = jnp.pad(w2, ((0, hid_p - hidfeat), (0, out_p - outfeat)))
    b2_2d = jnp.reshape(b2, (1, -1))
    b2_p = b2_2d if out_p == outfeat else jnp.pad(b2_2d, ((0, 0), (0, out_p - outfeat)))

    grid = (n_pad // tile_m,)

    out_full = pl.pallas_call(
        _discriminator_kernel,
        out_shape=jax.ShapeDtypeStruct((n_pad, out_p), x.dtype),
        grid_spec=pltpu.PrefetchScalarGridSpec(
            num_scalar_prefetch=0,
            grid=grid,
            in_specs=[
                pl.BlockSpec((tile_m, infeat), lambda i: (i, 0)),   # x tile
                pl.BlockSpec((infeat, hid_p), lambda i: (0, 0)),    # w1 (resident)
                pl.BlockSpec((1, hid_p), lambda i: (0, 0)),         # b1
                pl.BlockSpec((hid_p, out_p), lambda i: (0, 0)),     # w2 (resident)
                pl.BlockSpec((1, out_p), lambda i: (0, 0)),         # b2
            ],
            out_specs=pl.BlockSpec((tile_m, out_p), lambda i: (i, 0)),
        ),
        compiler_params=pltpu.CompilerParams(
            dimension_semantics=("parallel",),
        ),
    )(x_p, w1_p, b1_p, w2_p, b2_p)

    if n_pad == N and out_p == outfeat:
        return out_full
    return out_full[:N, :outfeat]


def _reference(x, w1, b1, w2, b2):
    h = x @ w1 + jnp.reshape(b1, (1, -1))
    h = jnp.where(h > 0, h, 0.01 * h)
    return jax.nn.sigmoid(h @ w2 + jnp.reshape(b2, (1, -1)))


if __name__ == "__main__":
    # Small shapes consistent with Discriminator(infeat, hidfeat, outfeat, dropout).
    N, infeat, hidfeat, outfeat = 256, 16, 32, 8
    dropout_p = 0.5  # eval mode -> identity

    key = jax.random.PRNGKey(0)
    k_x, k_w1, k_b1, k_w2, k_b2, k_x2 = jax.random.split(key, 6)

    x = jax.random.normal(k_x, (N, infeat), dtype=jnp.float32)

    # Deterministic parameter init (uniform like PyTorch's Linear default range).
    bound1 = 1.0 / (infeat ** 0.5)
    bound2 = 1.0 / (hidfeat ** 0.5)
    w1 = jax.random.uniform(k_w1, (infeat, hidfeat), jnp.float32, -bound1, bound1)
    b1 = jax.random.uniform(k_b1, (hidfeat,), jnp.float32, -bound1, bound1)
    w2 = jax.random.uniform(k_w2, (hidfeat, outfeat), jnp.float32, -bound2, bound2)
    b2 = jax.random.uniform(k_b2, (outfeat,), jnp.float32, -bound2, bound2)

    out = jax.block_until_ready(discriminator_forward(x, w1, b1, w2, b2))
    ref = _reference(x, w1, b1, w2, b2)
    assert out.shape == (N, outfeat)
    # approx reciprocal in the sigmoid -> slightly loosened tolerance
    assert jnp.allclose(out, ref, atol=2e-3, rtol=2e-3), "mismatch vs reference"

    # Ragged batch (not a multiple of the tile) exercises the pad/slice path.
    x2 = jax.random.normal(k_x2, (37, infeat), dtype=jnp.float32)
    out2 = jax.block_until_ready(discriminator_forward(x2, w1, b1, w2, b2))
    ref2 = _reference(x2, w1, b1, w2, b2)
    assert out2.shape == (37, outfeat)
    assert jnp.allclose(out2, ref2, atol=2e-3, rtol=2e-3), "mismatch vs reference (ragged N)"

    print("KERNEL_OK")
</pallas_src>

<mosaic_0001>
module attributes {stable_mosaic.version = 11 : i64} {
  func.func @_discriminator_kernel(%arg0: i32, %arg1: memref<128x16xf32, #tpu.memory_space<vmem>>, %arg2: memref<16x128xf32, #tpu.memory_space<vmem>>, %arg3: memref<1x128xf32, #tpu.memory_space<vmem>>, %arg4: memref<128x128xf32, #tpu.memory_space<vmem>>, %arg5: memref<1x128xf32, #tpu.memory_space<vmem>>, %arg6: memref<128x128xf32, #tpu.memory_space<vmem>>) attributes {dimension_semantics = [#tpu.dimension_semantics<parallel>], iteration_bounds = array<i64: 2>, scalar_prefetch = 0 : i64, scratch_operands = 0 : i64, tpu.core_type = #tpu.core_type<tc>, window_params = [{transform_indices = @transform_0, window_bounds = array<i64: 128, 16>}, {pipeline_mode = #tpu.pipeline_mode<synchronous>, transform_indices = @transform_1, window_bounds = array<i64: 16, 128>}, {pipeline_mode = #tpu.pipeline_mode<synchronous>, transform_indices = @transform_2, window_bounds = array<i64: 1, 128>}, {pipeline_mode = #tpu.pipeline_mode<synchronous>, transform_indices = @transform_3, window_bounds = array<i64: 128, 128>}, {pipeline_mode = #tpu.pipeline_mode<synchronous>, transform_indices = @transform_4, window_bounds = array<i64: 1, 128>}, {transform_indices = @transform_5, window_bounds = array<i64: 128, 128>}]} {
    %c0 = arith.constant 0 : index
    %c0_0 = arith.constant 0 : index
    %0 = vector.load %arg1[%c0, %c0_0] : memref<128x16xf32, #tpu.memory_space<vmem>>, vector<128x16xf32>
    %c0_1 = arith.constant 0 : index
    %c0_2 = arith.constant 0 : index
    %1 = vector.load %arg2[%c0_1, %c0_2] : memref<16x128xf32, #tpu.memory_space<vmem>>, vector<16x128xf32>
    %cst = arith.constant dense<0.000000e+00> : vector<128x128xf32>
    %2 = tpu.matmul %0, %1, %cst {dimension_numbers = #tpu.dot_dimension_numbers<[1], [0], [0], [1], [0, 0, 1, 1], [], []>} : vector<128x16xf32>, vector<16x128xf32>, vector<128x128xf32> -> vector<128x128xf32>
    %c0_3 = arith.constant 0 : index
    %c0_4 = arith.constant 0 : index
    %3 = vector.load %arg3[%c0_3, %c0_4] : memref<1x128xf32, #tpu.memory_space<vmem>>, vector<1x128xf32>
    %4 = vector.broadcast %3 : vector<1x128xf32> to vector<128x128xf32>
    %5 = arith.addf %2, %4 : vector<128x128xf32>
    %cst_5 = arith.constant 0.000000e+00 : f32
    %6 = vector.broadcast %cst_5 : f32 to vector<128x128xf32>
    %7 = arith.cmpf ogt, %5, %6 : vector<128x128xf32>
    %cst_6 = arith.constant 0.00999999977 : f32
    %8 = vector.broadcast %cst_6 : f32 to vector<128x128xf32>
    %9 = arith.mulf %8, %5 : vector<128x128xf32>
    %10 = arith.select %7, %5, %9 : vector<128x128xi1>, vector<128x128xf32>
    %c0_7 = arith.constant 0 : index
    %c0_8 = arith.constant 0 : index
    %11 = vector.load %arg4[%c0_7, %c0_8] : memref<128x128xf32, #tpu.memory_space<vmem>>, vector<128x128xf32>
    %cst_9 = arith.constant dense<0.000000e+00> : vector<128x128xf32>
    %12 = tpu.matmul %10, %11, %cst_9 {dimension_numbers = #tpu.dot_dimension_numbers<[1], [0], [0], [1], [0, 0, 1, 1], [], []>} : vector<128x128xf32>, vector<128x128xf32>, vector<128x128xf32> -> vector<128x128xf32>
    %c0_10 = arith.constant 0 : index
    %c0_11 = arith.constant 0 : index
    %13 = vector.load %arg5[%c0_10, %c0_11] : memref<1x128xf32, #tpu.memory_space<vmem>>, vector<1x128xf32>
    %14 = vector.broadcast %13 : vector<1x128xf32> to vector<128x128xf32>
    %15 = arith.addf %12, %14 : vector<128x128xf32>
    %cst_12 = arith.constant 0.000000e+00 : f32
    %16 = vector.broadcast %cst_12 : f32 to vector<128x128xf32>
    %17 = arith.subf %16, %15 : vector<128x128xf32>
    %18 = math.exp %17 : vector<128x128xf32>
    %cst_13 = arith.constant 1.000000e+00 : f32
    %19 = vector.broadcast %cst_13 : f32 to vector<128x128xf32>
    %20 = arith.addf %19, %18 : vector<128x128xf32>
    %21 = tpu.reciprocal %20 {approx = true} : vector<128x128xf32> -> vector<128x128xf32>
    %c0_14 = arith.constant 0 : index
    %c0_15 = arith.constant 0 : index
    %22 = vector.load %arg6[%c0_14, %c0_15] : memref<128x128xf32, #tpu.memory_space<vmem>>, vector<128x128xf32>
    tpu.vector_store %arg6[%c0_14, %c0_15], %21 {strides = array<i32>} : memref<128x128xf32, #tpu.memory_space<vmem>>, vector<128x128xf32>,
    return
  }
  func.func @transform_0(%arg0: i32) -> (i32, i32) {
    %c0_i32 = arith.constant 0 : i32
    %c0_i32_0 = arith.constant 0 : i32
    return %arg0, %c0_i32 : i32, i32
  }
  func.func @transform_1(%arg0: i32) -> (i32, i32) {
    %c0_i32 = arith.constant 0 : i32
    %c0_i32_0 = arith.constant 0 : i32
    %c0_i32_1 = arith.constant 0 : i32
    return %c0_i32, %c0_i32_0 : i32, i32
  }
  func.func @transform_2(%arg0: i32) -> (i32, i32) {
    %c0_i32 = arith.constant 0 : i32
    %c0_i32_0 = arith.constant 0 : i32
    %c0_i32_1 = arith.constant 0 : i32
    return %c0_i32, %c0_i32_0 : i32, i32
  }
  func.func @transform_3(%arg0: i32) -> (i32, i32) {
    %c0_i32 = arith.constant 0 : i32
    %c0_i32_0 = arith.constant 0 : i32
    %c0_i32_1 = arith.constant 0 : i32
    return %c0_i32, %c0_i32_0 : i32, i32
  }
  func.func @transform_4(%arg0: i32) -> (i32, i32) {
    %c0_i32 = arith.constant 0 : i32
    %c0_i32_0 = arith.constant 0 : i32
    %c0_i32_1 = arith.constant 0 : i32
    return %c0_i32, %c0_i32_0 : i32, i32
  }
  func.func @transform_5(%arg0: i32) -> (i32, i32) {
    %c0_i32 = arith.constant 0 : i32
    %c0_i32_0 = arith.constant 0 : i32
    return %arg0, %c0_i32 : i32, i32
  }
}

</mosaic_0001>

<llo_original>
// kernel: tpu_custom_call.1
$region0: #{tpu_custom_call.1}
  #allocation0 [shape = 'u32[]', space=smem, size = 0x4, offset = 0x4, fixed_abs, tag = 'smem constant byte address 0x4 - core index']
  #allocation1 [shape = 'u32[144,128]{1,0:T(1,128)}', space=vmem, size = 0x12000, scoped, tag = 'internal scratch']
  %s0 = inlined_call_operand.vmem [shape: f32[256,16], index: 0, kind: input, shape index: {}]
  %s1 = inlined_call_operand.vmem [shape: f32[16,128], index: 1, kind: input, shape index: {}]
  %s2 = inlined_call_operand.vmem [shape: f32[1,128], index: 2, kind: input, shape index: {}]
  %s3 = inlined_call_operand.vmem [shape: f32[128,128], index: 3, kind: input, shape index: {}]
  %s4 = inlined_call_operand.vmem [shape: f32[1,128], index: 4, kind: input, shape index: {}]
  %s5 = inlined_call_operand.hbm [shape: f32[256,128], index: 5, kind: output, shape index: {}]
  %s6 = sld [smem:[#allocation0]]
  $region53: #{tpu_custom_call.1} parent=0
    _
  %s8 = ssub.s32 1, %s6
  %s9 = scalar_select 0, %s8, %s6
  $region1: #{tpu_custom_call.1} parent=0
    #allocation2 [shape = 'u8[131072]{0}', space=vmem, size = 0x20000, scoped, tag = 'output window, operand 0']
    #allocation3 [shape = 's32[2]{0}', space=sflag, size = 0x8, scoped, tag = 'scoped memory for tpu_custom_call.1']
    %10 = vsyncpa [#allocation3], 0
    %s11 = scalar_lea.sflag [#allocation3], 1
    %12 = vsyncpa %s11, 0
    loop: start=0, step=1, limit=4
    $region2: #{tpu_custom_call.1} parent=1 // loop_pre_header
      _
    $region3: #{tpu_custom_call.1} parent=1 // loop_header
      %s14 = sphi 0, %s18
      %p15 = scmp.ge.s32.totalorder %s14, 4
      %s24 = sphi 0, %s26
      %s27 = sphi 0, %s24
      %s28 = sphi 0, %s27
      %s44 = sphi 0, %s28
      %s48 = sphi 0, %s48
      %s50 = sphi 0, %s48
      %s51 = sphi 0, %s50
      %s65 = sphi 0, %s51
      %s69 = sphi 0, %s69
      %s71 = sphi 0, %s69
      %s72 = sphi 0, %s71
      %s86 = sphi 0, %s72
      %s90 = sphi 0, %s90
      %s92 = sphi 0, %s90
      %s93 = sphi 0, %s92
      %s107 = sphi 0, %s93
      %s111 = sphi 0, %s111
      %s113 = sphi 0, %s111
      %s114 = sphi 0, %s113
      %s128 = sphi 0, %s114
      %s134 = sphi 0, %s136
      %s137 = sphi 0, %s134
      %s138 = sphi 0, %s137
      %s154 = sphi 0, %s138
    $region4: #{tpu_custom_call.1} parent=1 // loop_header_branch
      %17 = sbr.rel (%p15) target = $region8
    $region5: #{tpu_custom_call.1} parent=1 // loop_body
      %s19 = ssub.s32 %s14, 1
      %s20 = ssub.s32 %s14, 2
      %s21 = sadd.s32 %s14, 1
      %s22 = ssub.s32 %s14, %s21
      %p23 = scmp.eq.s32.totalorder %s22, 0
      %s25 = sadd.s32 %s24, 1
      %s26 = scalar_select %p23, %s24, %s25
      %p29 = pneg %p23
      %p30 = scmp.eq.s32.totalorder %s14, 1
      %p31 = por %p29, %p30
      %p32 = scmp.ne.s32.totalorder %s24, %s27
      %p33 = scmp.eq.s32.totalorder %s14, 0
      %p34 = por %p32, %p33
      %p35 = scmp.ne.s32.totalorder %s24, %s27
      %p36 = scmp.eq.s32.totalorder %s19, 1
      %p37 = por %p35, %p36
      %p38 = scmp.ne.s32.totalorder %s27, %s28
      %p39 = scmp.eq.s32.totalorder %s19, 0
      %p40 = por %p38, %p39
      %p41 = scmp.ne.s32.totalorder %s27, %s28
      %p42 = scmp.eq.s32.totalorder %s20, 1
      %p43 = por %p41, %p42
      %p45 = scmp.ne.s32.totalorder %s28, %s44
      %p46 = scmp.eq.s32.totalorder %s20, 0
      %p47 = por %p45, %p46
      %s49 = sadd.s32 %s48, 1
      %p52 = scmp.eq.s32.totalorder %s14, 1
      %p53 = scmp.ne.s32.totalorder %s48, %s50
      %p54 = scmp.eq.s32.totalorder %s14, 0
      %p55 = por %p53, %p54
      %p56 = scmp.ne.s32.totalorder %s48, %s50
      %p57 = scmp.eq.s32.totalorder %s19, 1
      %p58 = por %p56, %p57
      %p59 = scmp.ne.s32.totalorder %s50, %s51
      %p60 = scmp.eq.s32.totalorder %s19, 0
      %p61 = por %p59, %p60
      %p62 = scmp.ne.s32.totalorder %s50, %s51
      %p63 = scmp.eq.s32.totalorder %s20, 1
      %p64 = por %p62, %p63
      %p66 = scmp.ne.s32.totalorder %s51, %s65
      %p67 = scmp.eq.s32.totalorder %s20, 0
      %p68 = por %p66, %p67
      %s70 = sadd.s32 %s69, 1
      %p73 = scmp.eq.s32.totalorder %s14, 1
      %p74 = scmp.ne.s32.totalorder %s69, %s71
      %p75 = scmp.eq.s32.totalorder %s14, 0
      %p76 = por %p74, %p75
      %p77 = scmp.ne.s32.totalorder %s69, %s71
      %p78 = scmp.eq.s32.totalorder %s19, 1
      %p79 = por %p77, %p78
      %p80 = scmp.ne.s32.totalorder %s71, %s72
      %p81 = scmp.eq.s32.totalorder %s19, 0
      %p82 = por %p80, %p81
      %p83 = scmp.ne.s32.totalorder %s71, %s72
      %p84 = scmp.eq.s32.totalorder %s20, 1
      %p85 = por %p83, %p84
      %p87 = scmp.ne.s32.totalorder %s72, %s86
      %p88 = scmp.eq.s32.totalorder %s20, 0
      %p89 = por %p87, %p88
      %s91 = sadd.s32 %s90, 1
      %p94 = scmp.eq.s32.totalorder %s14, 1
      %p95 = scmp.ne.s32.totalorder %s90, %s92
      %p96 = scmp.eq.s32.totalorder %s14, 0
      %p97 = por %p95, %p96
      %p98 = scmp.ne.s32.totalorder %s90, %s92
      %p99 = scmp.eq.s32.totalorder %s19, 1
      %p100 = por %p98, %p99
      %p101 = scmp.ne.s32.totalorder %s92, %s93
      %p102 = scmp.eq.s32.totalorder %s19, 0
      %p103 = por %p101, %p102
      %p104 = scmp.ne.s32.totalorder %s92, %s93
      %p105 = scmp.eq.s32.totalorder %s20, 1
      %p106 = por %p104, %p105
      %p108 = scmp.ne.s32.totalorder %s93, %s107
      %p109 = scmp.eq.s32.totalorder %s20, 0
      %p110 = por %p108, %p109
      %s112 = sadd.s32 %s111, 1
      %p115 = scmp.eq.s32.totalorder %s14, 1
      %p116 = scmp.ne.s32.totalorder %s111, %s113
      %p117 = scmp.eq.s32.totalorder %s14, 0
      %p118 = por %p116, %p117
      %p119 = scmp.ne.s32.totalorder %s111, %s113
      %p120 = scmp.eq.s32.totalorder %s19, 1
      %p121 = por %p119, %p120
      %p122 = scmp.ne.s32.totalorder %s113, %s114
      %p123 = scmp.eq.s32.totalorder %s19, 0
      %p124 = por %p122, %p123
      %p125 = scmp.ne.s32.totalorder %s113, %s114
      %p126 = scmp.eq.s32.totalorder %s20, 1
      %p127 = por %p125, %p126
      %p129 = scmp.ne.s32.totalorder %s114, %s128
      %p130 = scmp.eq.s32.totalorder %s20, 0
      %p131 = por %p129, %p130
      %s132 = ssub.s32 %s14, %s21
      %p133 = scmp.eq.s32.totalorder %s132, 0
      %s135 = sadd.s32 %s134, 1
      %s136 = scalar_select %p133, %s134, %s135
      %p139 = pneg %p133
      %p140 = scmp.eq.s32.totalorder %s14, 1
      %p141 = por %p139, %p140
      %p142 = scmp.ne.s32.totalorder %s134, %s137
      %p143 = scmp.eq.s32.totalorder %s14, 0
      %p144 = por %p142, %p143
      %p145 = scmp.ne.s32.totalorder %s134, %s137
      %p146 = scmp.eq.s32.totalorder %s19, 1
      %p147 = por %p145, %p146
      %p148 = scmp.ne.s32.totalorder %s137, %s138
      %p149 = scmp.eq.s32.totalorder %s19, 0
      %p150 = por %p148, %p149
      %p151 = scmp.ne.s32.totalorder %s137, %s138
      %p152 = scmp.eq.s32.totalorder %s20, 1
      %p153 = por %p151, %p152
      %p155 = scmp.ne.s32.totalorder %s138, %s154
      %p156 = scmp.eq.s32.totalorder %s20, 0
      %p157 = por %p155, %p156
      %p158 = scmp.le.s32.totalorder 1, %s14
      %p159 = scmp.lt.s32.totalorder %s14, 3
      %p160 = pnand %p158, %p159
      %p161 = pneg %p160
      // Predicated region
      $region9: #{tpu_custom_call.1} parent=5 // pred_check
        _
      $region10: #{tpu_custom_call.1} parent=5 // pred_check_branch
        %163 = sbr.rel (%p160) target = $region12
      $region11: #{tpu_custom_call.1} parent=5 // pred_region
        %s164 = ssub.s32 %s14, 1
        // Predicated region
        $region13: #{tpu_custom_call.1} parent=11 // pred_check
          %p165 = pneg %p61
        $region14: #{tpu_custom_call.1} parent=11 // pred_check_branch
          %167 = sbr.rel (%p165) target = $region16
        $region15: #{tpu_custom_call.1} parent=11 // pred_region
          _
        $region16: #{tpu_custom_call.1} parent=11 // pred_fallthru
          _
        // Predicated region
        $region17: #{tpu_custom_call.1} parent=11 // pred_check
          %p168 = pneg %p82
        $region18: #{tpu_custom_call.1} parent=11 // pred_check_branch
          %170 = sbr.rel (%p168) target = $region20
        $region19: #{tpu_custom_call.1} parent=11 // pred_region
          _
        $region20: #{tpu_custom_call.1} parent=11 // pred_fallthru
          _
        // Predicated region
        $region21: #{tpu_custom_call.1} parent=11 // pred_check
          %p171 = pneg %p103
        $region22: #{tpu_custom_call.1} parent=11 // pred_check_branch
          %173 = sbr.rel (%p171) target = $region24
        $region23: #{tpu_custom_call.1} parent=11 // pred_region
          _
        $region24: #{tpu_custom_call.1} parent=11 // pred_fallthru
          _
        // Predicated region
        $region25: #{tpu_custom_call.1} parent=11 // pred_check
          %p174 = pneg %p124
        $region26: #{tpu_custom_call.1} parent=11 // pred_check_branch
          %176 = sbr.rel (%p174) target = $region28
        $region27: #{tpu_custom_call.1} parent=11 // pred_region
          _
        $region28: #{tpu_custom_call.1} parent=11 // pred_fallthru
          _
      $region12: #{tpu_custom_call.1} parent=5 // pred_fallthru
        _
      %p177 = scmp.lt.s32.totalorder %s14, 2
      // Predicated region
      $region29: #{tpu_custom_call.1} parent=5 // pred_check
        %p178 = pneg %p177
      $region30: #{tpu_custom_call.1} parent=5 // pred_check_branch
        %180 = sbr.rel (%p178) target = $region32
      $region31: #{tpu_custom_call.1} parent=5 // pred_region
        // Predicated region
        $region33: #{tpu_custom_call.1} parent=31 // pred_check
          %p181 = pneg %p34
        $region34: #{tpu_custom_call.1} parent=31 // pred_check_branch
          %183 = sbr.rel (%p181) target = $region36
        $region35: #{tpu_custom_call.1} parent=31 // pred_region
          %s184 = smul.u32 16, %s14
          %p185 = scmp.lt.s32.totalorder %s184, 31
          %s186 = scalar_select %p185, %s184, 31
          %s187 = smul.addr %s186, 8
          %s188 = scalar_lea.vmem %s0, %s187
          %s189 = smul.u32 16, %s14
        $region36: #{tpu_custom_call.1} parent=31 // pred_fallthru
          _
      $region32: #{tpu_custom_call.1} parent=5 // pred_fallthru
        _
      %p190 = scmp.le.s32.totalorder 1, %s14
      %p191 = scmp.lt.s32.totalorder %s14, 3
      %p192 = pnand %p190, %p191
      %p193 = pneg %p192
      // Predicated region
      $region37: #{tpu_custom_call.1} parent=5 // pred_check
        _
      $region38: #{tpu_custom_call.1} parent=5 // pred_check_branch
        %195 = sbr.rel (%p192) target = $region40
      $region39: #{tpu_custom_call.1} parent=5 // pred_region
        %s196 = ssub.s32 %s14, 1
        %s197 = smul.u32 16, %s19
        %p198 = scmp.lt.s32.totalorder %s197, 31
        %s199 = scalar_select %p198, %s197, 31
        %s200 = smul.addr %s199, 8
        %s201 = scalar_lea.vmem %s0, %s200
        %p202 = pneg %p40
        %p203 = pneg %p37
        %p204 = pneg %p61
        %p205 = pneg %p58
        %p206 = pneg %p82
        %p207 = pneg %p79
        %p208 = pneg %p103
        %p209 = pneg %p100
        %p210 = pneg %p124
        %p211 = pneg %p121
        %p212 = pneg %p150
        %p213 = pneg %p147
        %s214 = sand.u32 %s137, 1
        %s215 = scalar_lea.sflag [#allocation3], %s214
        %s216 = sand.u32 %s137, 1
        %s217 = smul.addr %s216, 128
        %s218 = scalar_lea.vmem [#allocation2], %s217
        %s219 = smul.u32 16, %s19
        %p220 = scmp.lt.s32.totalorder %s219, 31
        %s221 = scalar_select %p220, %s219, 31
        %s222 = smul.addr %s221, 8
        %s223 = scalar_lea.vmem %s0, %s222
        %s224 = smul.u32 16, %s19
        %s225 = smul.u32 16, %s19
        %v226 = vld [vmem:[%s223] sm:$0xff]
        %v227 = vld [vmem:[%s223 + $0x8] sm:$0xff]
        %v228 = vld [vmem:[%s223 + $0x10] sm:$0xff]
        %v229 = vld [vmem:[%s223 + $0x18] sm:$0xff]
        %v230 = vld [vmem:[%s223 + $0x20] sm:$0xff]
        %v231 = vld [vmem:[%s223 + $0x28] sm:$0xff]
        %v232 = vld [vmem:[%s223 + $0x30] sm:$0xff]
        %v233 = vld [vmem:[%s223 + $0x38] sm:$0xff]
        %v234 = vld [vmem:[%s223 + $0x40] sm:$0xff]
        %v235 = vld [vmem:[%s223 + $0x48] sm:$0xff]
        %v236 = vld [vmem:[%s223 + $0x50] sm:$0xff]
        %v237 = vld [vmem:[%s223 + $0x58] sm:$0xff]
        %v238 = vld [vmem:[%s223 + $0x60] sm:$0xff]
        %v239 = vld [vmem:[%s223 + $0x68] sm:$0xff]
        %v240 = vld [vmem:[%s223 + $0x70] sm:$0xff]
        %v241 = vld [vmem:[%s223 + $0x78] sm:$0xff]
        %v242 = vld [vmem:[%s1] sm:$0xff]
        %v243 = vld [vmem:[%s1 + $0x8] sm:$0xff]
        %v244 = vld [vmem:[%s2] sm:$0x1]
        %v246 = vlaneseq
        %v247 = vshrl.u32 %v246, 7
        %v248 = vsub.s32 0, %v247
        %v249 = vrot.slane %v244, %v248
        %vm251 = vcmask 130048
        %v253 = vsel %vm251, %v226, 0
        %v256 = vsel %vm251, %v227, 0
        %v259 = vsel %vm251, %v228, 0
        %v262 = vsel %vm251, %v229, 0
        %v265 = vsel %vm251, %v230, 0
        %v268 = vsel %vm251, %v231, 0
        %v271 = vsel %vm251, %v232, 0
        %v274 = vsel %vm251, %v233, 0
        %v277 = vsel %vm251, %v234, 0
        %v280 = vsel %vm251, %v235, 0
        %v283 = vsel %vm251, %v236, 0
        %v286 = vsel %vm251, %v237, 0
        %v289 = vsel %vm251, %v238, 0
        %v292 = vsel %vm251, %v239, 0
        %v295 = vsel %vm251, %v240, 0
        %v298 = vsel %vm251, %v241, 0
        %300 = vmatprep.subr.mxu0 0.0
        %301 = vmatpush1.msra.mxu0 %v242
        %302 = vmatprep.subr.mxu0 0.0
        %303 = vmatpush1.msra.mxu0 %v243
        %304 = vmatprep.subr.mxu0 0.0
        %305 = vmatpush1.msra.mxu0 0.0
        %306 = vmatprep.subr.mxu0 0.0
        %307 = vmatpush1.msra.mxu0 0.0
        %308 = vmatprep.subr.mxu0 0.0
        %309 = vmatpush1.msra.mxu0 0.0
        %310 = vmatprep.subr.mxu0 0.0
        %311 = vmatpush1.msra.mxu0 0.0
        %312 = vmatprep.subr.mxu0 0.0
        %313 = vmatpush1.msra.mxu0 0.0
        %314 = vmatprep.subr.mxu0 0.0
        %315 = vmatpush1.msra.mxu0 0.0
        %316 = vmatprep.subr.mxu0 0.0
        %317 = vmatpush1.msra.mxu0 0.0
        %318 = vmatprep.subr.mxu0 0.0
        %319 = vmatpush1.msra.mxu0 0.0
        %320 = vmatprep.subr.mxu0 0.0
        %321 = vmatpush1.msra.mxu0 0.0
        %322 = vmatprep.subr.mxu0 0.0
        %323 = vmatpush1.msra.mxu0 0.0
        %324 = vmatprep.subr.mxu0 0.0
        %325 = vmatpush1.msra.mxu0 0.0
        %326 = vmatprep.subr.mxu0 0.0
        %327 = vmatpush1.msra.mxu0 0.0
        %328 = vmatprep.subr.mxu0 0.0
        %329 = vmatpush1.msra.mxu0 0.0
        %330 = vmatprep.subr.mxu0 0.0
        %331 = vmatpush1.msra.mxu0 0.0
        %332 = vmatprep.subr.mxu0 0.0
        %333 = vmatpush1.msra.mxu0 0.0
        %334 = vmatprep.subr.mxu0 0.0
        %335 = vmatpush1.msra.mxu0 0.0
        %336 = vmatprep.subr.mxu0 0.0
        %337 = vmatpush1.msra.mxu0 0.0
        %338 = vmatprep.subr.mxu0 0.0
        %339 = vmatpush1.msra.mxu0 0.0
        %340 = vmatprep.subr.mxu0 0.0
        %341 = vmatpush1.msra.mxu0 0.0
        %342 = vmatprep.subr.mxu0 0.0
        %343 = vmatpush1.msra.mxu0 0.0
        %344 = vmatprep.subr.mxu0 0.0
        %345 = vmatpush1.msra.mxu0 0.0
        %346 = vmatprep.subr.mxu0 0.0
        %347 = vmatpush1.msra.mxu0 0.0
        %348 = vmatprep.subr.mxu0 0.0
        %349 = vmatpush1.msra.mxu0 0.0
        %350 = vmatprep.subr.mxu0 0.0
        %351 = vmatpush1.msra.mxu0 0.0
        %352 = vmatprep.subr.mxu0 0.0
        %353 = vmatpush1.msra.mxu0 0.0
        %354 = vmatprep.subr.mxu0 0.0
        %355 = vmatpush1.msra.mxu0 0.0
        %356 = vmatprep.subr.mxu0 0.0
        %357 = vmatpush1.msra.mxu0 0.0
        %358 = vmatprep.subr.mxu0 0.0
        %359 = vmatpush1.msra.mxu0 0.0
        %360 = vmatprep.subr.mxu0 0.0
        %361 = vmatpush1.msra.mxu0 0.0
        %362 = vmatprep.subr.mxu0 0.0
        %363 = vmatpush1.msra.mxu0 0.0
        %364 = vmatprep.mubr.f32.mxu0 0.0
        %365 = vmatmul.mubr.f32.gmra.mrb[0].mxu0 %v253
        %v366 = vpop.f32.mrb[0].mxu0
        %v367 = vadd.f32 %v249, %v366
        %v368 = vpop.f32.mrb[0].mxu0
        %369 = vmatprep.mubr.f32.mxu0 0.0
        %370 = vmatmul.mubr.f32.gmra.mrb[0].mxu0 %v256
        %v371 = vpop.f32.mrb[0].mxu0
        %v372 = vadd.f32 %v249, %v371
        %v373 = vpop.f32.mrb[0].mxu0
        %374 = vmatprep.mubr.f32.mxu0 0.0
        %375 = vmatmul.mubr.f32.gmra.mrb[0].mxu0 %v259
        %v376 = vpop.f32.mrb[0].mxu0
        %v377 = vadd.f32 %v249, %v376
        %v378 = vpop.f32.mrb[0].mxu0
        %379 = vmatprep.mubr.f32.mxu0 0.0
        %380 = vmatmul.mubr.f32.gmra.mrb[0].mxu0 %v262
        %v381 = vpop.f32.mrb[0].mxu0
        %v382 = vadd.f32 %v249, %v381
        %v383 = vpop.f32.mrb[0].mxu0
        %384 = vmatprep.mubr.f32.mxu0 0.0
        %385 = vmatmul.mubr.f32.gmra.mrb[0].mxu0 %v265
        %v386 = vpop.f32.mrb[0].mxu0
        %v387 = vadd.f32 %v249, %v386
        %v388 = vpop.f32.mrb[0].mxu0
        %389 = vmatprep.mubr.f32.mxu0 0.0
        %390 = vmatmul.mubr.f32.gmra.mrb[0].mxu0 %v268
        %v391 = vpop.f32.mrb[0].mxu0
        %v392 = vadd.f32 %v249, %v391
        %v393 = vpop.f32.mrb[0].mxu0
        %394 = vmatprep.mubr.f32.mxu0 0.0
        %395 = vmatmul.mubr.f32.gmra.mrb[0].mxu0 %v271
        %v396 = vpop.f32.mrb[0].mxu0
        %v397 = vadd.f32 %v249, %v396
        %v398 = vpop.f32.mrb[0].mxu0
        %399 = vmatprep.mubr.f32.mxu0 0.0
        %400 = vmatmul.mubr.f32.gmra.mrb[0].mxu0 %v274
        %v401 = vpop.f32.mrb[0].mxu0
        %v402 = vadd.f32 %v249, %v401
        %v403 = vpop.f32.mrb[0].mxu0
        %404 = vmatprep.mubr.f32.mxu0 0.0
        %405 = vmatmul.mubr.f32.gmra.mrb[0].mxu0 %v277
        %v406 = vpop.f32.mrb[0].mxu0
        %v407 = vadd.f32 %v249, %v406
        %v408 = vpop.f32.mrb[0].mxu0
        %409 = vmatprep.mubr.f32.mxu0 0.0
        %410 = vmatmul.mubr.f32.gmra.mrb[0].mxu0 %v280
        %v411 = vpop.f32.mrb[0].mxu0
        %v412 = vadd.f32 %v249, %v411
        %v413 = vpop.f32.mrb[0].mxu0
        %414 = vmatprep.mubr.f32.mxu0 0.0
        %415 = vmatmul.mubr.f32.gmra.mrb[0].mxu0 %v283
        %v416 = vpop.f32.mrb[0].mxu0
        %v417 = vadd.f32 %v249, %v416
        %v418 = vpop.f32.mrb[0].mxu0
        %419 = vmatprep.mubr.f32.mxu0 0.0
        %420 = vmatmul.mubr.f32.gmra.mrb[0].mxu0 %v286
        %v421 = vpop.f32.mrb[0].mxu0
        %v422 = vadd.f32 %v249, %v421
        %v423 = vpop.f32.mrb[0].mxu0
        %424 = vmatprep.mubr.f32.mxu0 0.0
        %425 = vmatmul.mubr.f32.gmra.mrb[0].mxu0 %v289
        %v426 = vpop.f32.mrb[0].mxu0
        %v427 = vadd.f32 %v249, %v426
        %v428 = vpop.f32.mrb[0].mxu0
        %429 = vmatprep.mubr.f32.mxu0 0.0
        %430 = vmatmul.mubr.f32.gmra.mrb[0].mxu0 %v292
        %v431 = vpop.f32.mrb[0].mxu0
        %v432 = vadd.f32 %v249, %v431
        %v433 = vpop.f32.mrb[0].mxu0
        %434 = vmatprep.mubr.f32.mxu0 0.0
        %435 = vmatmul.mubr.f32.gmra.mrb[0].mxu0 %v295
        %v436 = vpop.f32.mrb[0].mxu0
        %v437 = vadd.f32 %v249, %v436
        %v438 = vpop.f32.mrb[0].mxu0
        %439 = vmatprep.mubr.f32.mxu0 0.0
        %440 = vmatmul.mubr.f32.gmra.mrb[0].mxu0 %v298
        %v441 = vpop.f32.mrb[0].mxu0
        %v442 = vadd.f32 %v249, %v441
        %v443 = vpop.f32.mrb[0].mxu0
        %444 = vdwg.mxu0
        %vm445 = vcmp.gt.f32.partialorder %v367, 0.0
        %vm446 = vcmp.gt.f32.partialorder %v372, 0.0
        %vm447 = vcmp.gt.f32.partialorder %v377, 0.0
        %vm448 = vcmp.gt.f32.partialorder %v382, 0.0
        %vm449 = vcmp.gt.f32.partialorder %v387, 0.0
        %vm450 = vcmp.gt.f32.partialorder %v392, 0.0
        %vm451 = vcmp.gt.f32.partialorder %v397, 0.0
        %vm452 = vcmp.gt.f32.partialorder %v402, 0.0
        %vm453 = vcmp.gt.f32.partialorder %v407, 0.0
        %vm454 = vcmp.gt.f32.partialorder %v412, 0.0
        %vm455 = vcmp.gt.f32.partialorder %v417, 0.0
        %vm456 = vcmp.gt.f32.partialorder %v422, 0.0
        %vm457 = vcmp.gt.f32.partialorder %v427, 0.0
        %vm458 = vcmp.gt.f32.partialorder %v432, 0.0
        %vm459 = vcmp.gt.f32.partialorder %v437, 0.0
        %vm460 = vcmp.gt.f32.partialorder %v442, 0.0
        %v461 = vmul.f32 %v367, 0.01
        %v462 = vmul.f32 %v372, 0.01
        %v463 = vmul.f32 %v377, 0.01
        %v464 = vmul.f32 %v382, 0.01
        %v465 = vmul.f32 %v387, 0.01
        %v466 = vmul.f32 %v392, 0.01
        %v467 = vmul.f32 %v397, 0.01
        %v468 = vmul.f32 %v402, 0.01
        %v469 = vmul.f32 %v407, 0.01
        %v470 = vmul.f32 %v412, 0.01
        %v471 = vmul.f32 %v417, 0.01
        %v472 = vmul.f32 %v422, 0.01
        %v473 = vmul.f32 %v427, 0.01
        %v474 = vmul.f32 %v432, 0.01
        %v475 = vmul.f32 %v437, 0.01
        %v476 = vmul.f32 %v442, 0.01
        %v477 = vsel %vm445, %v367, %v461
        %v478 = vsel %vm446, %v372, %v462
        %v479 = vsel %vm447, %v377, %v463
        %v480 = vsel %vm448, %v382, %v464
        %v481 = vsel %vm449, %v387, %v465
        %v482 = vsel %vm450, %v392, %v466
        %v483 = vsel %vm451, %v397, %v467
        %v484 = vsel %vm452, %v402, %v468
        %v485 = vsel %vm453, %v407, %v469
        %v486 = vsel %vm454, %v412, %v470
        %v487 = vsel %vm455, %v417, %v471
        %v488 = vsel %vm456, %v422, %v472
        %v489 = vsel %vm457, %v427, %v473
        %v490 = vsel %vm458, %v432, %v474
        %v491 = vsel %vm459, %v437, %v475
        %v492 = vsel %vm460, %v442, %v476
        %v493 = vld [vmem:[%s3] sm:$0xff]
        %v494 = vld [vmem:[%s3 + $0x8] sm:$0xff]
        %v495 = vld [vmem:[%s3 + $0x10] sm:$0xff]
        %v496 = vld [vmem:[%s3 + $0x18] sm:$0xff]
        %v497 = vld [vmem:[%s3 + $0x20] sm:$0xff]
        %v498 = vld [vmem:[%s3 + $0x28] sm:$0xff]
        %v499 = vld [vmem:[%s3 + $0x30] sm:$0xff]
        %v500 = vld [vmem:[%s3 + $0x38] sm:$0xff]
        %v501 = vld [vmem:[%s3 + $0x40] sm:$0xff]
        %v502 = vld [vmem:[%s3 + $0x48] sm:$0xff]
        %v503 = vld [vmem:[%s3 + $0x50] sm:$0xff]
        %v504 = vld [vmem:[%s3 + $0x58] sm:$0xff]
        %v505 = vld [vmem:[%s3 + $0x60] sm:$0xff]
        %v506 = vld [vmem:[%s3 + $0x68] sm:$0xff]
        %v507 = vld [vmem:[%s3 + $0x70] sm:$0xff]
        %v508 = vld [vmem:[%s3 + $0x78] sm:$0xff]
        %v509 = vld [vmem:[%s4] sm:$0x1]
        %v511 = vlaneseq
        %v512 = vshrl.u32 %v511, 7
        %v513 = vsub.s32 0, %v512
        %v514 = vrot.slane %v509, %v513
        %516 = vmatprep.subr.mxu0 0.0
        %517 = vmatpush1.msra.mxu0 %v493
        %518 = vmatprep.subr.mxu0 0.0
        %519 = vmatpush1.msra.mxu0 %v494
        %520 = vmatprep.subr.mxu0 0.0
        %521 = vmatpush1.msra.mxu0 %v495
        %522 = vmatprep.subr.mxu0 0.0
        %523 = vmatpush1.msra.mxu0 %v496
        %524 = vmatprep.subr.mxu0 0.0
        %525 = vmatpush1.msra.mxu0 %v497
        %526 = vmatprep.subr.mxu0 0.0
        %527 = vmatpush1.msra.mxu0 %v498
        %528 = vmatprep.subr.mxu0 0.0
        %529 = vmatpush1.msra.mxu0 %v499
        %530 = vmatprep.subr.mxu0 0.0
        %531 = vmatpush1.msra.mxu0 %v500
        %532 = vmatprep.subr.mxu0 0.0
        %533 = vmatpush1.msra.mxu0 %v501
        %534 = vmatprep.subr.mxu0 0.0
        %535 = vmatpush1.msra.mxu0 %v502
        %536 = vmatprep.subr.mxu0 0.0
        %537 = vmatpush1.msra.mxu0 %v503
        %538 = vmatprep.subr.mxu0 0.0
        %539 = vmatpush1.msra.mxu0 %v504
        %540 = vmatprep.subr.mxu0 0.0
        %541 = vmatpush1.msra.mxu0 %v505
        %542 = vmatprep.subr.mxu0 0.0
        %543 = vmatpush1.msra.mxu0 %v506
        %544 = vmatprep.subr.mxu0 0.0
        %545 = vmatpush1.msra.mxu0 %v507
        %546 = vmatprep.subr.mxu0 0.0
        %547 = vmatpush1.msra.mxu0 %v508
        %548 = vmatprep.subr.mxu0 0.0
        %549 = vmatpush1.msra.mxu0 0.0
        %550 = vmatprep.subr.mxu0 0.0
        %551 = vmatpush1.msra.mxu0 0.0
        %552 = vmatprep.subr.mxu0 0.0
        %553 = vmatpush1.msra.mxu0 0.0
        %554 = vmatprep.subr.mxu0 0.0
        %555 = vmatpush1.msra.mxu0 0.0
        %556 = vmatprep.subr.mxu0 0.0
        %557 = vmatpush1.msra.mxu0 0.0
        %558 = vmatprep.subr.mxu0 0.0
        %559 = vmatpush1.msra.mxu0 0.0
        %560 = vmatprep.subr.mxu0 0.0
        %561 = vmatpush1.msra.mxu0 0.0
        %562 = vmatprep.subr.mxu0 0.0
        %563 = vmatpush1.msra.mxu0 0.0
        %564 = vmatprep.subr.mxu0 0.0
        %565 = vmatpush1.msra.mxu0 0.0
        %566 = vmatprep.subr.mxu0 0.0
        %567 = vmatpush1.msra.mxu0 0.0
        %568 = vmatprep.subr.mxu0 0.0
        %569 = vmatpush1.msra.mxu0 0.0
        %570 = vmatprep.subr.mxu0 0.0
        %571 = vmatpush1.msra.mxu0 0.0
        %572 = vmatprep.subr.mxu0 0.0
        %573 = vmatpush1.msra.mxu0 0.0
        %574 = vmatprep.subr.mxu0 0.0
        %575 = vmatpush1.msra.mxu0 0.0
        %576 = vmatprep.subr.mxu0 0.0
        %577 = vmatpush1.msra.mxu0 0.0
        %578 = vmatprep.subr.mxu0 0.0
        %579 = vmatpush1.msra.mxu0 0.0
        %580 = vmatprep.mubr.f32.mxu0 0.0
        %581 = vmatmul.mubr.f32.gmra.mrb[0].mxu0 %v477
        %v582 = vpop.f32.mrb[0].mxu0
        %v583 = vadd.f32 %v514, %v582
        %v584 = vpop.f32.mrb[0].mxu0
        %585 = vmatprep.mubr.f32.mxu0 0.0
        %586 = vmatmul.mubr.f32.gmra.mrb[0].mxu0 %v478
        %v587 = vpop.f32.mrb[0].mxu0
        %v588 = vadd.f32 %v514, %v587
        %v589 = vpop.f32.mrb[0].mxu0
        %590 = vmatprep.mubr.f32.mxu0 0.0
        %591 = vmatmul.mubr.f32.gmra.mrb[0].mxu0 %v479
        %v592 = vpop.f32.mrb[0].mxu0
        %v593 = vadd.f32 %v514, %v592
        %v594 = vpop.f32.mrb[0].mxu0
        %595 = vmatprep.mubr.f32.mxu0 0.0
        %596 = vmatmul.mubr.f32.gmra.mrb[0].mxu0 %v480
        %v597 = vpop.f32.mrb[0].mxu0
        %v598 = vadd.f32 %v514, %v597
        %v599 = vpop.f32.mrb[0].mxu0
        %600 = vmatprep.mubr.f32.mxu0 0.0
        %601 = vmatmul.mubr.f32.gmra.mrb[0].mxu0 %v481
        %v602 = vpop.f32.mrb[0].mxu0
        %v603 = vadd.f32 %v514, %v602
        %v604 = vpop.f32.mrb[0].mxu0
        %605 = vmatprep.mubr.f32.mxu0 0.0
        %606 = vmatmul.mubr.f32.gmra.mrb[0].mxu0 %v482
        %v607 = vpop.f32.mrb[0].mxu0
        %v608 = vadd.f32 %v514, %v607
        %v609 = vpop.f32.mrb[0].mxu0
        %610 = vmatprep.mubr.f32.mxu0 0.0
        %611 = vmatmul.mubr.f32.gmra.mrb[0].mxu0 %v483
        %v612 = vpop.f32.mrb[0].mxu0
        %v613 = vadd.f32 %v514, %v612
        %v614 = vpop.f32.mrb[0].mxu0
        %615 = vmatprep.mubr.f32.mxu0 0.0
        %616 = vmatmul.mubr.f32.gmra.mrb[0].mxu0 %v484
        %v617 = vpop.f32.mrb[0].mxu0
        %v618 = vadd.f32 %v514, %v617
        %v619 = vpop.f32.mrb[0].mxu0
        %620 = vmatprep.mubr.f32.mxu0 0.0
        %621 = vmatmul.mubr.f32.gmra.mrb[0].mxu0 %v485
        %v622 = vpop.f32.mrb[0].mxu0
        %v623 = vadd.f32 %v514, %v622
        %v624 = vpop.f32.mrb[0].mxu0
        %625 = vmatprep.mubr.f32.mxu0 0.0
        %626 = vmatmul.mubr.f32.gmra.mrb[0].mxu0 %v486
        %v627 = vpop.f32.mrb[0].mxu0
        %v628 = vadd.f32 %v514, %v627
        %v629 = vpop.f32.mrb[0].mxu0
        %630 = vmatprep.mubr.f32.mxu0 0.0
        %631 = vmatmul.mubr.f32.gmra.mrb[0].mxu0 %v487
        %v632 = vpop.f32.mrb[0].mxu0
        %v633 = vadd.f32 %v514, %v632
        %v634 = vpop.f32.mrb[0].mxu0
        %635 = vmatprep.mubr.f32.mxu0 0.0
        %636 = vmatmul.mubr.f32.gmra.mrb[0].mxu0 %v488
        %v637 = vpop.f32.mrb[0].mxu0
        %v638 = vadd.f32 %v514, %v637
        %v639 = vpop.f32.mrb[0].mxu0
        %640 = vmatprep.mubr.f32.mxu0 0.0
        %641 = vmatmul.mubr.f32.gmra.mrb[0].mxu0 %v489
        %v642 = vpop.f32.mrb[0].mxu0
        %v643 = vadd.f32 %v514, %v642
        %v644 = vpop.f32.mrb[0].mxu0
        %645 = vmatprep.mubr.f32.mxu0 0.0
        %646 = vmatmul.mubr.f32.gmra.mrb[0].mxu0 %v490
        %v647 = vpop.f32.mrb[0].mxu0
        %v648 = vadd.f32 %v514, %v647
        %v649 = vpop.f32.mrb[0].mxu0
        %650 = vmatprep.mubr.f32.mxu0 0.0
        %651 = vmatmul.mubr.f32.gmra.mrb[0].mxu0 %v491
        %v652 = vpop.f32.mrb[0].mxu0
        %v653 = vadd.f32 %v514, %v652
        %v654 = vpop.f32.mrb[0].mxu0
        %655 = vmatprep.mubr.f32.mxu0 0.0
        %656 = vmatmul.mubr.f32.gmra.mrb[0].mxu0 %v492
        %v657 = vpop.f32.mrb[0].mxu0
        %v658 = vadd.f32 %v514, %v657
        %v659 = vpop.f32.mrb[0].mxu0
        %660 = vdwg.mxu0
        %v661 = vsub.f32 0.0, %v583
        %v662 = vsub.f32 0.0, %v588
        %v663 = vsub.f32 0.0, %v593
        %v664 = vsub.f32 0.0, %v598
        %v665 = vsub.f32 0.0, %v603
        %v666 = vsub.f32 0.0, %v608
        %v667 = vsub.f32 0.0, %v613
        %v668 = vsub.f32 0.0, %v618
        %v669 = vsub.f32 0.0, %v623
        %v670 = vsub.f32 0.0, %v628
        %v671 = vsub.f32 0.0, %v633
        %v672 = vsub.f32 0.0, %v638
        %v673 = vsub.f32 0.0, %v643
        %v674 = vsub.f32 0.0, %v648
        %v675 = vsub.f32 0.0, %v653
        %v676 = vsub.f32 0.0, %v658
        %v677 = vmul.f32 %v661, 1.442695
        %v678 = vpow.pop %v677
        %v679 = vmul.f32 %v662, 1.442695
        %v680 = vpow.pop %v679
        %v681 = vmul.f32 %v663, 1.442695
        %v682 = vpow.pop %v681
        %v683 = vmul.f32 %v664, 1.442695
        %v684 = vpow.pop %v683
        %v685 = vmul.f32 %v665, 1.442695
        %v686 = vpow.pop %v685
        %v687 = vmul.f32 %v666, 1.442695
        %v688 = vpow.pop %v687
        %v689 = vmul.f32 %v667, 1.442695
        %v690 = vpow.pop %v689
        %v691 = vmul.f32 %v668, 1.442695
        %v692 = vpow.pop %v691
        %v693 = vmul.f32 %v669, 1.442695
        %v694 = vpow.pop %v693
        %v695 = vmul.f32 %v670, 1.442695
        %v696 = vpow.pop %v695
        %v697 = vmul.f32 %v671, 1.442695
        %v698 = vpow.pop %v697
        %v699 = vmul.f32 %v672, 1.442695
        %v700 = vpow.pop %v699
        %v701 = vmul.f32 %v673, 1.442695
        %v702 = vpow.pop %v701
        %v703 = vmul.f32 %v674, 1.442695
        %v704 = vpow.pop %v703
        %v705 = vmul.f32 %v675, 1.442695
        %v706 = vpow.pop %v705
        %v707 = vmul.f32 %v676, 1.442695
        %v708 = vpow.pop %v707
        %v709 = vadd.f32 %v678, 1.0
        %v710 = vadd.f32 %v680, 1.0
        %v711 = vadd.f32 %v682, 1.0
        %v712 = vadd.f32 %v684, 1.0
        %v713 = vadd.f32 %v686, 1.0
        %v714 = vadd.f32 %v688, 1.0
        %v715 = vadd.f32 %v690, 1.0
        %v716 = vadd.f32 %v692, 1.0
        %v717 = vadd.f32 %v694, 1.0
        %v718 = vadd.f32 %v696, 1.0
        %v719 = vadd.f32 %v698, 1.0
        %v720 = vadd.f32 %v700, 1.0
        %v721 = vadd.f32 %v702, 1.0
        %v722 = vadd.f32 %v704, 1.0
        %v723 = vadd.f32 %v706, 1.0
        %v724 = vadd.f32 %v708, 1.0
        %v725 = vrcp.pop %v709
        %v726 = vrcp.pop %v710
        %v727 = vrcp.pop %v711
        %v728 = vrcp.pop %v712
        %v729 = vrcp.pop %v713
        %v730 = vrcp.pop %v714
        %v731 = vrcp.pop %v715
        %v732 = vrcp.pop %v716
        %v733 = vrcp.pop %v717
        %v734 = vrcp.pop %v718
        %v735 = vrcp.pop %v719
        %v736 = vrcp.pop %v720
        %v737 = vrcp.pop %v721
        %v738 = vrcp.pop %v722
        %v739 = vrcp.pop %v723
        %v740 = vrcp.pop %v724
        %741 = vst [vmem:[%s218] sm:$0xff] %v725
        %742 = vst [vmem:[%s218 + $0x8] sm:$0xff] %v726
        %743 = vst [vmem:[%s218 + $0x10] sm:$0xff] %v727
        %744 = vst [vmem:[%s218 + $0x18] sm:$0xff] %v728
        %745 = vst [vmem:[%s218 + $0x20] sm:$0xff] %v729
        %746 = vst [vmem:[%s218 + $0x28] sm:$0xff] %v730
        %747 = vst [vmem:[%s218 + $0x30] sm:$0xff] %v731
        %748 = vst [vmem:[%s218 + $0x38] sm:$0xff] %v732
        %749 = vst [vmem:[%s218 + $0x40] sm:$0xff] %v733
        %750 = vst [vmem:[%s218 + $0x48] sm:$0xff] %v734
        %751 = vst [vmem:[%s218 + $0x50] sm:$0xff] %v735
        %752 = vst [vmem:[%s218 + $0x58] sm:$0xff] %v736
        %753 = vst [vmem:[%s218 + $0x60] sm:$0xff] %v737
        %754 = vst [vmem:[%s218 + $0x68] sm:$0xff] %v738
        %755 = vst [vmem:[%s218 + $0x70] sm:$0xff] %v739
        %756 = vst [vmem:[%s218 + $0x78] sm:$0xff] %v740
        %s757 = sand.u32 %s137, 1
        %s758 = scalar_lea.sflag [#allocation3], %s757
        %s759 = sand.u32 %s137, 1
        %s760 = smul.addr %s759, 128
        %s761 = scalar_lea.vmem [#allocation2], %s760
        // Predicated region
        $region41: #{tpu_custom_call.1} parent=39 // pred_check
          %p762 = pneg %p147
        $region42: #{tpu_custom_call.1} parent=39 // pred_check_branch
          %764 = sbr.rel (%p762) target = $region44
        $region43: #{tpu_custom_call.1} parent=39 // pred_region
          %s765 = smul.u32 16, %s19
          %s767 = ssub.s32 2048, 2048
          %768 = vsyncadd %s758, %s767
          %s769 = smul.addr %s765, 128
          %s770 = scalar_lea.hbm %s5, %s769
          %s771 = sshll.u32 %s761, 4
          %s772 = int_to_ptr.vmem [resolvable:$true] %s771
          %777 = dma.vmem_to_hbm [thread:$0]  %s772, 2048, %s770, %s758, 128, 128, 8
        $region44: #{tpu_custom_call.1} parent=39 // pred_fallthru
          _
      $region40: #{tpu_custom_call.1} parent=5 // pred_fallthru
        _
      %p778 = scmp.le.s32.totalorder 2, %s14
      // Predicated region
      $region45: #{tpu_custom_call.1} parent=5 // pred_check
        %p779 = pneg %p778
      $region46: #{tpu_custom_call.1} parent=5 // pred_check_branch
        %781 = sbr.rel (%p779) target = $region48
      $region47: #{tpu_custom_call.1} parent=5 // pred_region
        %s782 = ssub.s32 %s14, 2
        // Predicated region
        $region49: #{tpu_custom_call.1} parent=47 // pred_check
          %p783 = pneg %p153
        $region50: #{tpu_custom_call.1} parent=47 // pred_check_branch
          %785 = sbr.rel (%p783) target = $region52
        $region51: #{tpu_custom_call.1} parent=47 // pred_region
          %s786 = sand.u32 %s138, 1
          %s787 = scalar_lea.sflag [#allocation3], %s786
          %s788 = sand.u32 %s138, 1
          %s789 = smul.addr %s788, 128
          %s790 = scalar_lea.vmem [#allocation2], %s789
          %791 = dma.done %s787, 2048
        $region52: #{tpu_custom_call.1} parent=47 // pred_fallthru
          _
      $region48: #{tpu_custom_call.1} parent=5 // pred_fallthru
        _
    $region6: #{tpu_custom_call.1} parent=1 // loop_footer
      %s18 = sadd.s32 1, %s14
    $region7: #{tpu_custom_call.1} parent=1 // loop_footer_branch
      %13 = sbr.rel target = $region3
    $region8: #{tpu_custom_call.1} parent=1 // loop_exit
      _
    %792 = vsyncpa [#allocation3], 1
    %s793 = scalar_lea.sflag [#allocation3], 1
    %794 = vsyncpa %s793, 1

</llo_original>
